<compile_context>
chip_gen: v5e
topology: v5e:2x2
jax: 0.10.0
libtpu: 0.0.40
codegen_flags: <defaults>
</compile_context>

<pallas_src>
import functools

import jax
import jax.numpy as jnp
from jax.experimental import pallas as pl
from jax.experimental.pallas import tpu as pltpu

_LANES = 128


def _round_up(n: int, m: int) -> int:
    return ((n + m - 1) // m) * m


def _logreg_kernel(w_ref, b_ref, x_ref, o_ref):
    # w_ref: [3, 3] (SMEM), b_ref: [1, 3] (SMEM)
    # x_ref / o_ref: [3, SB, 128] (VMEM) — feature-major, batch packed on
    # (sublane, lane), so every row below is a dense [SB, 128] tile.
    x0 = x_ref[0]
    x1 = x_ref[1]
    x2 = x_ref[2]

    # Linear: logits[k] = sum_j w[k, j] * x[j] + b[k]   (pure full-width VPU FMAs)
    l0 = w_ref[0, 0] * x0 + w_ref[0, 1] * x1 + w_ref[0, 2] * x2 + b_ref[0, 0]
    l1 = w_ref[1, 0] * x0 + w_ref[1, 1] * x1 + w_ref[1, 2] * x2 + b_ref[0, 1]
    l2 = w_ref[2, 0] * x0 + w_ref[2, 1] * x1 + w_ref[2, 2] * x2 + b_ref[0, 2]

    # Numerically stable log_softmax across the 3 feature rows — elementwise only
    # (one exp + one log per element; padded/ragged tail columns may hold garbage
    # but the math is lane-local, never trapped, and those columns are discarded).
    m = jnp.maximum(jnp.maximum(l0, l1), l2)
    s0 = l0 - m
    s1 = l1 - m
    s2 = l2 - m
    lse = jnp.log(jnp.exp(s0) + jnp.exp(s1) + jnp.exp(s2))

    o_ref[0] = (s0 - lse).astype(o_ref.dtype)
    o_ref[1] = (s1 - lse).astype(o_ref.dtype)
    o_ref[2] = (s2 - lse).astype(o_ref.dtype)


@functools.partial(jax.jit, static_argnames=("block_b",))
def logistic_regression(x, weight, bias, *, block_b: int = 131072):
    """x: [B, 3] f32, weight: [3, 3] f32 (out, in), bias: [3] f32 -> [B, 3] f32."""
    B, IN = x.shape
    OUT = weight.shape[0]
    L = _LANES

    # ---- tile selection (SB = sublane-groups of 128 batch rows per block) ----
    B_pad = _round_up(B, L)          # only pad to 128-lane alignment (<=127 cols)
    NB = B_pad // L                  # number of 128-wide lane groups

    # Cap so the double-buffered in+out working set stays ~<=12 MiB (fits every
    # generation with headroom); robust to non-multiple-of-1024 block_b values.
    SB_cap = max(8, (block_b // L) // 8 * 8)
    SB_cap = min(SB_cap, 2048)

    if NB <= 16:
        SB = NB                                          # single block (== full dim)
    else:
        # Keep ~4 grid steps when the batch is big enough so v7x's 2 TCs share it.
        SB = min(SB_cap, max(8, _round_up(pl.cdiv(NB, 4), 8)))
    grid = (pl.cdiv(NB, SB),)        # ragged last block is fine (tail is don't-care)

    # ---- one XLA-side layout pass: transpose (+ tiny pad) + free reshape ----
    xT = jnp.transpose(x)                                # [IN, B]
    if B_pad != B:
        xT = jnp.pad(xT, ((0, 0), (0, B_pad - B)))       # fused with the transpose
    xP = xT.reshape(IN, NB, L)                           # free, contiguous
    bias2d = bias.reshape(1, OUT)

    outP = pl.pallas_call(
        _logreg_kernel,
        out_shape=jax.ShapeDtypeStruct((OUT, NB, L), x.dtype),
        grid=grid,
        in_specs=[
            # Weight & bias: tiny scalar tables, resident in SMEM.
            pl.BlockSpec(memory_space=pltpu.MemorySpace.SMEM),
            pl.BlockSpec(memory_space=pltpu.MemorySpace.SMEM),
            # x streamed as sublane+lane-dense [3, SB, 128] tiles along the batch.
            pl.BlockSpec((IN, SB, L), lambda i: (0, i, 0)),
        ],
        out_specs=pl.BlockSpec((OUT, SB, L), lambda i: (0, i, 0)),
        compiler_params=pltpu.CompilerParams(
            dimension_semantics=("parallel",),           # v7x: shard batch over 2 TCs
            vmem_limit_bytes=32 * 1024 * 1024,           # keep pipelining on v5e/v7x
        ),
    )(weight, bias2d, xP)

    # Back to the module's [B, OUT] contract (slice + transpose fuse in XLA).
    return jnp.transpose(outP.reshape(OUT, B_pad)[:, :B])


def _reference(x, weight, bias):
    logits = x @ weight.T + bias
    return jax.nn.log_softmax(logits, axis=1)


if __name__ == "__main__":
    key = jax.random.PRNGKey(0)
    kx, kw, kb = jax.random.split(key, 3)

    # Small deterministic inputs consistent with nn.Linear(3, 3): batch=8, features=3.
    x = jax.random.normal(kx, (8, 3), dtype=jnp.float32)
    bound = 1.0 / jnp.sqrt(3.0)
    weight = jax.random.uniform(kw, (3, 3), minval=-bound, maxval=bound, dtype=jnp.float32)
    bias = jax.random.uniform(kb, (3,), minval=-bound, maxval=bound, dtype=jnp.float32)

    out = logistic_regression(x, weight, bias)
    out = jax.block_until_ready(out)

    ref = _reference(x, weight, bias)
    assert out.shape == (8, 3)
    assert jnp.allclose(out, ref, atol=1e-5, rtol=1e-5), "mismatch vs reference"

    print("KERNEL_OK")
</pallas_src>

<mosaic_0001>
module attributes {stable_mosaic.version = 11 : i64} {
  func.func @_logreg_kernel(%arg0: i32, %arg1: memref<3x3xf32, #tpu.memory_space<smem>>, %arg2: memref<1x3xf32, #tpu.memory_space<smem>>, %arg3: memref<3x1x128xf32, #tpu.memory_space<vmem>>, %arg4: memref<3x1x128xf32, #tpu.memory_space<vmem>>) attributes {dimension_semantics = [#tpu.dimension_semantics<parallel>], iteration_bounds = array<i64: 1>, scalar_prefetch = 0 : i64, scratch_operands = 0 : i64, tpu.core_type = #tpu.core_type<tc>, window_params = [{transform_indices = @transform_0, window_bounds = array<i64: 3, 3>}, {transform_indices = @transform_1, window_bounds = array<i64: 1, 3>}, {transform_indices = @transform_2, window_bounds = array<i64: 3, 1, 128>}, {transform_indices = @transform_3, window_bounds = array<i64: 3, 1, 128>}]} {
    %c0 = arith.constant 0 : index
    %c0_0 = arith.constant 0 : index
    %c0_1 = arith.constant 0 : index
    %0 = vector.load %arg3[%c0, %c0_0, %c0_1] : memref<3x1x128xf32, #tpu.memory_space<vmem>>, vector<1x1x128xf32>
    %1 = vector.shape_cast %0 : vector<1x1x128xf32> to vector<1x128xf32>
    %c1 = arith.constant 1 : index
    %c0_2 = arith.constant 0 : index
    %c0_3 = arith.constant 0 : index
    %2 = vector.load %arg3[%c1, %c0_2, %c0_3] : memref<3x1x128xf32, #tpu.memory_space<vmem>>, vector<1x1x128xf32>
    %3 = vector.shape_cast %2 : vector<1x1x128xf32> to vector<1x128xf32>
    %c2 = arith.constant 2 : index
    %c0_4 = arith.constant 0 : index
    %c0_5 = arith.constant 0 : index
    %4 = vector.load %arg3[%c2, %c0_4, %c0_5] : memref<3x1x128xf32, #tpu.memory_space<vmem>>, vector<1x1x128xf32>
    %5 = vector.shape_cast %4 : vector<1x1x128xf32> to vector<1x128xf32>
    %c0_6 = arith.constant 0 : index
    %c0_7 = arith.constant 0 : index
    %6 = memref.load %arg1[%c0_6, %c0_7] : memref<3x3xf32, #tpu.memory_space<smem>>
    %7 = vector.broadcast %6 : f32 to vector<1x128xf32>
    %8 = arith.mulf %7, %1 : vector<1x128xf32>
    %c0_8 = arith.constant 0 : index
    %c1_9 = arith.constant 1 : index
    %9 = memref.load %arg1[%c0_8, %c1_9] : memref<3x3xf32, #tpu.memory_space<smem>>
    %10 = vector.broadcast %9 : f32 to vector<1x128xf32>
    %11 = arith.mulf %10, %3 : vector<1x128xf32>
    %12 = arith.addf %8, %11 : vector<1x128xf32>
    %c0_10 = arith.constant 0 : index
    %c2_11 = arith.constant 2 : index
    %13 = memref.load %arg1[%c0_10, %c2_11] : memref<3x3xf32, #tpu.memory_space<smem>>
    %14 = vector.broadcast %13 : f32 to vector<1x128xf32>
    %15 = arith.mulf %14, %5 : vector<1x128xf32>
    %16 = arith.addf %12, %15 : vector<1x128xf32>
    %c0_12 = arith.constant 0 : index
    %c0_13 = arith.constant 0 : index
    %17 = memref.load %arg2[%c0_12, %c0_13] : memref<1x3xf32, #tpu.memory_space<smem>>
    %18 = vector.broadcast %17 : f32 to vector<1x128xf32>
    %19 = arith.addf %16, %18 : vector<1x128xf32>
    %c1_14 = arith.constant 1 : index
    %c0_15 = arith.constant 0 : index
    %20 = memref.load %arg1[%c1_14, %c0_15] : memref<3x3xf32, #tpu.memory_space<smem>>
    %21 = vector.broadcast %20 : f32 to vector<1x128xf32>
    %22 = arith.mulf %21, %1 : vector<1x128xf32>
    %c1_16 = arith.constant 1 : index
    %c1_17 = arith.constant 1 : index
    %23 = memref.load %arg1[%c1_16, %c1_17] : memref<3x3xf32, #tpu.memory_space<smem>>
    %24 = vector.broadcast %23 : f32 to vector<1x128xf32>
    %25 = arith.mulf %24, %3 : vector<1x128xf32>
    %26 = arith.addf %22, %25 : vector<1x128xf32>
    %c1_18 = arith.constant 1 : index
    %c2_19 = arith.constant 2 : index
    %27 = memref.load %arg1[%c1_18, %c2_19] : memref<3x3xf32, #tpu.memory_space<smem>>
    %28 = vector.broadcast %27 : f32 to vector<1x128xf32>
    %29 = arith.mulf %28, %5 : vector<1x128xf32>
    %30 = arith.addf %26, %29 : vector<1x128xf32>
    %c0_20 = arith.constant 0 : index
    %c1_21 = arith.constant 1 : index
    %31 = memref.load %arg2[%c0_20, %c1_21] : memref<1x3xf32, #tpu.memory_space<smem>>
    %32 = vector.broadcast %31 : f32 to vector<1x128xf32>
    %33 = arith.addf %30, %32 : vector<1x128xf32>
    %c2_22 = arith.constant 2 : index
    %c0_23 = arith.constant 0 : index
    %34 = memref.load %arg1[%c2_22, %c0_23] : memref<3x3xf32, #tpu.memory_space<smem>>
    %35 = vector.broadcast %34 : f32 to vector<1x128xf32>
    %36 = arith.mulf %35, %1 : vector<1x128xf32>
    %c2_24 = arith.constant 2 : index
    %c1_25 = arith.constant 1 : index
    %37 = memref.load %arg1[%c2_24, %c1_25] : memref<3x3xf32, #tpu.memory_space<smem>>
    %38 = vector.broadcast %37 : f32 to vector<1x128xf32>
    %39 = arith.mulf %38, %3 : vector<1x128xf32>
    %40 = arith.addf %36, %39 : vector<1x128xf32>
    %c2_26 = arith.constant 2 : index
    %c2_27 = arith.constant 2 : index
    %41 = memref.load %arg1[%c2_26, %c2_27] : memref<3x3xf32, #tpu.memory_space<smem>>
    %42 = vector.broadcast %41 : f32 to vector<1x128xf32>
    %43 = arith.mulf %42, %5 : vector<1x128xf32>
    %44 = arith.addf %40, %43 : vector<1x128xf32>
    %c0_28 = arith.constant 0 : index
    %c2_29 = arith.constant 2 : index
    %45 = memref.load %arg2[%c0_28, %c2_29] : memref<1x3xf32, #tpu.memory_space<smem>>
    %46 = vector.broadcast %45 : f32 to vector<1x128xf32>
    %47 = arith.addf %44, %46 : vector<1x128xf32>
    %48 = arith.maximumf %19, %33 : vector<1x128xf32>
    %49 = arith.maximumf %48, %47 : vector<1x128xf32>
    %50 = arith.subf %19, %49 : vector<1x128xf32>
    %51 = arith.subf %33, %49 : vector<1x128xf32>
    %52 = arith.subf %47, %49 : vector<1x128xf32>
    %53 = math.exp %50 : vector<1x128xf32>
    %54 = math.exp %51 : vector<1x128xf32>
    %55 = arith.addf %53, %54 : vector<1x128xf32>
    %56 = math.exp %52 : vector<1x128xf32>
    %57 = arith.addf %55, %56 : vector<1x128xf32>
    %58 = math.log %57 : vector<1x128xf32>
    %59 = arith.subf %50, %58 : vector<1x128xf32>
    %c0_30 = arith.constant 0 : index
    %c0_31 = arith.constant 0 : index
    %c0_32 = arith.constant 0 : index
    %60 = vector.load %arg4[%c0_30, %c0_31, %c0_32] : memref<3x1x128xf32, #tpu.memory_space<vmem>>, vector<1x1x128xf32>
    %61 = vector.shape_cast %60 : vector<1x1x128xf32> to vector<1x128xf32>
    %62 = vector.shape_cast %59 : vector<1x128xf32> to vector<1x1x128xf32>
    tpu.vector_store %arg4[%c0_30, %c0_31, %c0_32], %62 {strides = array<i32>} : memref<3x1x128xf32, #tpu.memory_space<vmem>>, vector<1x1x128xf32>,
    %63 = arith.subf %51, %58 : vector<1x128xf32>
    %c1_33 = arith.constant 1 : index
    %c0_34 = arith.constant 0 : index
    %c0_35 = arith.constant 0 : index
    %64 = vector.load %arg4[%c1_33, %c0_34, %c0_35] : memref<3x1x128xf32, #tpu.memory_space<vmem>>, vector<1x1x128xf32>
    %65 = vector.shape_cast %64 : vector<1x1x128xf32> to vector<1x128xf32>
    %66 = vector.shape_cast %63 : vector<1x128xf32> to vector<1x1x128xf32>
    tpu.vector_store %arg4[%c1_33, %c0_34, %c0_35], %66 {strides = array<i32>} : memref<3x1x128xf32, #tpu.memory_space<vmem>>, vector<1x1x128xf32>,
    %67 = arith.subf %52, %58 : vector<1x128xf32>
    %c2_36 = arith.constant 2 : index
    %c0_37 = arith.constant 0 : index
    %c0_38 = arith.constant 0 : index
    %68 = vector.load %arg4[%c2_36, %c0_37, %c0_38] : memref<3x1x128xf32, #tpu.memory_space<vmem>>, vector<1x1x128xf32>
    %69 = vector.shape_cast %68 : vector<1x1x128xf32> to vector<1x128xf32>
    %70 = vector.shape_cast %67 : vector<1x128xf32> to vector<1x1x128xf32>
    tpu.vector_store %arg4[%c2_36, %c0_37, %c0_38], %70 {strides = array<i32>} : memref<3x1x128xf32, #tpu.memory_space<vmem>>, vector<1x1x128xf32>,
    return
  }
  func.func @transform_0(%arg0: i32) -> (i32, i32) {
    %c0_i32 = arith.constant 0 : i32
    %c0_i32_0 = arith.constant 0 : i32
    %c0_i32_1 = arith.constant 0 : i32
    return %c0_i32, %c0_i32_0 : i32, i32
  }
  func.func @transform_1(%arg0: i32) -> (i32, i32) {
    %c0_i32 = arith.constant 0 : i32
    %c0_i32_0 = arith.constant 0 : i32
    %c0_i32_1 = arith.constant 0 : i32
    return %c0_i32, %c0_i32_0 : i32, i32
  }
  func.func @transform_2(%arg0: i32) -> (i32, i32, i32) {
    %c0_i32 = arith.constant 0 : i32
    %c0_i32_0 = arith.constant 0 : i32
    %c0_i32_1 = arith.constant 0 : i32
    return %c0_i32, %arg0, %c0_i32_0 : i32, i32, i32
  }
  func.func @transform_3(%arg0: i32) -> (i32, i32, i32) {
    %c0_i32 = arith.constant 0 : i32
    %c0_i32_0 = arith.constant 0 : i32
    %c0_i32_1 = arith.constant 0 : i32
    return %c0_i32, %arg0, %c0_i32_0 : i32, i32, i32
  }
}

</mosaic_0001>

<llo_original>
// kernel: logistic_regression.1
$region0: #{logistic_regression.1}
  #allocation0 [shape = 'u32[]', space=smem, size = 0x4, offset = 0x4, fixed_abs, tag = 'smem constant byte address 0x4 - core index']
  #allocation1 [shape = 'u32[72,128]{1,0:T(1,128)}', space=vmem, size = 0x9000, scoped, tag = 'internal scratch']
  %s0 = inlined_call_operand.vmem [shape: f32[3,3], index: 0, kind: input, shape index: {}]
  %s1 = inlined_call_operand.vmem [shape: f32[1,3], index: 1, kind: input, shape index: {}]
  %s2 = inlined_call_operand.vmem [shape: f32[3,1,128], index: 2, kind: input, shape index: {}]
  %s3 = inlined_call_operand.vmem [shape: f32[3,1,128], index: 3, kind: output, shape index: {}]
  %s4 = sld [smem:[#allocation0]]
  $region30: #{logistic_regression.1} parent=0
    _
  %s6 = ssub.s32 1, %s4
  %s7 = scalar_select 0, %s6, %s4
  $region1: #{logistic_regression.1} parent=0
    #allocation2 [shape = 'u8[2048]{0}', space=smem, size = 0x800, scoped, tag = 'input window, operand 0, single buffered']
    #allocation3 [shape = 's32[1]{0}', space=sflag, size = 0x4, scoped, tag = 'scoped memory for logistic_regression.1']
    #allocation4 [shape = 'u8[512]{0}', space=smem, size = 0x200, scoped, tag = 'input window, operand 1, single buffered']
    #allocation5 [shape = 's32[1]{0}', space=sflag, size = 0x4, scoped, tag = 'scoped memory for logistic_regression.1']
    %8 = vsyncpa [#allocation3], 0
    %9 = vsyncpa [#allocation5], 0
    // Predicated region
    $region2: #{logistic_regression.1} parent=1 // pred_check
      _
    $region3: #{logistic_regression.1} parent=1 // pred_check_branch
      %11 = sbr.rel (0) target = $region5
    $region4: #{logistic_regression.1} parent=1 // pred_region
      %13 = vsyncadd [#allocation3], 0
      %s15 = sshll.u32 %s0, 4
      %s16 = int_to_ptr.vmem [resolvable:$true] %s15
      %18 = dma.vmem_to_smem %s16, 64, [#allocation2], [#allocation3]
    $region5: #{logistic_regression.1} parent=1 // pred_fallthru
      _
    // Predicated region
    $region6: #{logistic_regression.1} parent=1 // pred_check
      _
    $region7: #{logistic_regression.1} parent=1 // pred_check_branch
      %20 = sbr.rel (0) target = $region9
    $region8: #{logistic_regression.1} parent=1 // pred_region
      %22 = vsyncadd [#allocation5], 0
      %s24 = sshll.u32 %s1, 4
      %s25 = int_to_ptr.vmem [resolvable:$true] %s24
      %27 = dma.vmem_to_smem %s25, 16, [#allocation4], [#allocation5]
    $region9: #{logistic_regression.1} parent=1 // pred_fallthru
      _
    // Predicated region
    $region10: #{logistic_regression.1} parent=1 // pred_check
      _
    $region11: #{logistic_regression.1} parent=1 // pred_check_branch
      %29 = sbr.rel (0) target = $region13
    $region12: #{logistic_regression.1} parent=1 // pred_region
      _
    $region13: #{logistic_regression.1} parent=1 // pred_fallthru
      _
    // Predicated region
    $region14: #{logistic_regression.1} parent=1 // pred_check
      _
    $region15: #{logistic_regression.1} parent=1 // pred_check_branch
      %31 = sbr.rel (0) target = $region17
    $region16: #{logistic_regression.1} parent=1 // pred_region
      %33 = dma.done [#allocation3], 64
    $region17: #{logistic_regression.1} parent=1 // pred_fallthru
      _
    // Predicated region
    $region18: #{logistic_regression.1} parent=1 // pred_check
      _
    $region19: #{logistic_regression.1} parent=1 // pred_check_branch
      %35 = sbr.rel (0) target = $region21
    $region20: #{logistic_regression.1} parent=1 // pred_region
      %37 = dma.done [#allocation5], 16
    $region21: #{logistic_regression.1} parent=1 // pred_fallthru
      _
    %38 = sfence
    %v39 = vld [vmem:[%s2] sm:$0x1]
    %s40 = scalar_lea.vmem %s2, 1
    %v41 = vld [vmem:[%s40] sm:$0x1]
    %s42 = scalar_lea.vmem %s2, 2
    %v43 = vld [vmem:[%s42] sm:$0x1]
    %s44 = sld [smem:[#allocation2]]
    %v45 = vstv %s44
    %v46 = vmul.f32 %v45, %v39
    %s47 = sld [smem:[#allocation2 + $0x1]]
    %v48 = vstv %s47
    %v49 = vmul.f32 %v48, %v41
    %v50 = vadd.f32 %v46, %v49
    %s51 = sld [smem:[#allocation2 + $0x2]]
    %v52 = vstv %s51
    %v53 = vmul.f32 %v52, %v43
    %v54 = vadd.f32 %v50, %v53
    %s55 = sld [smem:[#allocation4]]
    %v56 = vstv %s55
    %v57 = vadd.f32 %v54, %v56
    %s58 = sld [smem:[#allocation2 + $0x80]]
    %v59 = vstv %s58
    %v60 = vmul.f32 %v59, %v39
    %s61 = sld [smem:[#allocation2 + $0x81]]
    %v62 = vstv %s61
    %v63 = vmul.f32 %v62, %v41
    %v64 = vadd.f32 %v60, %v63
    %s65 = sld [smem:[#allocation2 + $0x82]]
    %v66 = vstv %s65
    %v67 = vmul.f32 %v66, %v43
    %v68 = vadd.f32 %v64, %v67
    %s69 = sld [smem:[#allocation4 + $0x1]]
    %v70 = vstv %s69
    %v71 = vadd.f32 %v68, %v70
    %s72 = sld [smem:[#allocation2 + $0x100]]
    %v73 = vstv %s72
    %v74 = vmul.f32 %v73, %v39
    %s75 = sld [smem:[#allocation2 + $0x101]]
    %v76 = vstv %s75
    %v77 = vmul.f32 %v76, %v41
    %v78 = vadd.f32 %v74, %v77
    %s79 = sld [smem:[#allocation2 + $0x102]]
    %v80 = vstv %s79
    %v81 = vmul.f32 %v80, %v43
    %v82 = vadd.f32 %v78, %v81
    %s83 = sld [smem:[#allocation4 + $0x2]]
    %v84 = vstv %s83
    %v85 = vadd.f32 %v82, %v84
    %v86 = vmax.f32 %v57, %v71
    %v87 = vmax.f32 %v86, %v85
    %v88 = vsub.f32 %v57, %v87
    %v89 = vsub.f32 %v71, %v87
    %v90 = vsub.f32 %v85, %v87
    %v91 = vmul.f32 %v88, 1.442695
    %v92 = vpow.pop %v91
    %v93 = vmul.f32 %v89, 1.442695
    %v94 = vpow.pop %v93
    %v95 = vadd.f32 %v92, %v94
    %v96 = vmul.f32 %v90, 1.442695
    %v97 = vpow.pop %v96
    %v98 = vadd.f32 %v95, %v97
    %v99 = vlog2.pop %v98
    %v100 = vmul.f32 %v99, 0.6931472
    %v101 = vsub.f32 %v88, %v100
    %102 = vst [vmem:[%s3] sm:$0x1] %v101
    %v103 = vsub.f32 %v89, %v100
    %s104 = scalar_lea.vmem %s3, 1
    %105 = vst [vmem:[%s104] sm:$0x1] %v103
    %v106 = vsub.f32 %v90, %v100
    %s107 = scalar_lea.vmem %s3, 2
    %108 = vst [vmem:[%s107] sm:$0x1] %v106
    // Predicated region
    $region22: #{logistic_regression.1} parent=1 // pred_check
      _
    $region23: #{logistic_regression.1} parent=1 // pred_check_branch
      %110 = sbr.rel (0) target = $region25
    $region24: #{logistic_regression.1} parent=1 // pred_region
      _
    $region25: #{logistic_regression.1} parent=1 // pred_fallthru
      _
    // Predicated region
    $region26: #{logistic_regression.1} parent=1 // pred_check
      _
    $region27: #{logistic_regression.1} parent=1 // pred_check_branch
      %112 = sbr.rel (0) target = $region29
    $region28: #{logistic_regression.1} parent=1 // pred_region
      _
    $region29: #{logistic_regression.1} parent=1 // pred_fallthru
      _
    %113 = vsyncpa [#allocation3], 1
    %114 = vsyncpa [#allocation5], 1

</llo_original>
